<compile_context>
chip_gen: v7x
topology: tpu7x:2x2x1
jax: 0.10.0
libtpu: 0.0.40
codegen_flags: <defaults>
</compile_context>

<pallas_src>
import jax
import jax.numpy as jnp
from jax import lax
from jax.experimental import pallas as pl
from jax.experimental.pallas import tpu as pltpu

BN_EPS = 1e-5
DEN_EPS = 1e-6


def gatedgcn_kernel(
    x_ref, ex_ref, s_ref, t_ref, snn_ref, sne_ref,
    wn_ref, bfused_ref, wc_ref, bc_ref,
    gh_ref, bh_ref, ge_ref, bee_ref,
    h_out_ref, e_out_ref,
):
    f32 = jnp.float32
    bf16 = jnp.bfloat16
    Dp = x_ref.shape[1]          # lane-padded feature width (multiple of 128)

    X = x_ref[...]               # [N, Dp]  f32 (kept f32 for the residual)
    EXin = ex_ref[...]           # [M, Dp]  f32
    S = s_ref[...]               # [M, N]   bf16 one-hot source incidence
    T = t_ref[...]               # [M, N]   bf16 one-hot dest incidence

    # --- fused node projections: X @ [Wb|Wd|Wa|We] (one wide MXU matmul) ---------
    # TODO(synk): on v5e, also cast X / wn to bf16 here (f32 MXU has no fast path).
    Y = jnp.dot(X, wn_ref[...], preferred_element_type=f32) + bfused_ref[...]
    BXDX = Y[:, : 2 * Dp]                 # (BX || DX) contiguous -> gather operand
    AX = Y[:, 2 * Dp: 3 * Dp]
    EXn = Y[:, 3 * Dp:]
    CE = jnp.dot(EXin, wc_ref[...], preferred_element_type=f32) + bc_ref[...]

    # --- message_func: gather src/dst projections onto edges (bf16 MXU, f32 acc) --
    SB = jnp.dot(S, BXDX.astype(bf16), preferred_element_type=f32)   # [M, 2Dp]
    Bx_src = SB[:, :Dp]                   # edges.src['BX']
    Dx_src = SB[:, Dp:]                   # edges.src['DX']
    Ex_dst = jnp.dot(T, EXn.astype(bf16), preferred_element_type=f32)  # edges.dst['EX']
    e = CE + Dx_src + Ex_dst              # edges.data['E']            [M, Dp]

    # --- reduce_func: sigmoid-gated mean over incoming edges ----------------------
    # One fused T^T @ [sig*Bx || sig] without ever materializing T^T.
    sig = jax.nn.sigmoid(e)
    gated = jnp.concatenate([sig * Bx_src, sig], axis=1).astype(bf16)  # [M, 2Dp]
    red = lax.dot_general(T, gated, (((0,), (0,)), ((), ())),
                          preferred_element_type=f32)                  # [N, 2Dp]
    num = red[:, :Dp]
    den = red[:, Dp:]
    H = AX + num * pl.reciprocal(den + DEN_EPS, approx=True)

    # --- graph-size normalization --------------------------------------------------
    H = H * snn_ref[...]
    E = e * sne_ref[...]

    # --- BatchNorm1d (training-mode forward: batch mean, biased var) + ReLU + res --
    def _batchnorm(v, g, b):
        m = jnp.mean(v, axis=0, keepdims=True)
        var = jnp.mean((v - m) ** 2, axis=0, keepdims=True)
        return (v - m) * lax.rsqrt(var + BN_EPS) * g + b

    h_out_ref[...] = X + jnp.maximum(_batchnorm(H, gh_ref[...], bh_ref[...]), 0.0)
    e_out_ref[...] = EXin + jnp.maximum(_batchnorm(E, ge_ref[...], bee_ref[...]), 0.0)


def gatedgcn_layer(X, E_X, S, T, snorm_n, snorm_e, params):
    N, Din = X.shape
    M = E_X.shape[0]
    Dout = params["wa"].shape[1]
    assert Din == Dout, "residual connection requires input_dim == output_dim"

    # Lane-pad the feature dim to a multiple of 128 (lane-dense vregs / stores).
    Dp = ((Dout + 127) // 128) * 128

    def pad_cols(a):                      # [R, D] -> [R, Dp]
        return jnp.pad(a, ((0, 0), (0, Dp - a.shape[1])))

    def pad_w(w):                         # [Din, Dout] -> [Dp, Dp]
        return jnp.pad(w, ((0, Dp - w.shape[0]), (0, Dp - w.shape[1])))

    Xp = pad_cols(X)
    EXp_in = pad_cols(E_X)

    # Fuse node-projection weights/biases in order [B, D, A, E] so that the gather
    # operand (BX || DX) is a contiguous slice of the fused projection output.
    w_node = jnp.concatenate(
        [pad_w(params["wb"]), pad_w(params["wd"]),
         pad_w(params["wa"]), pad_w(params["we"])], axis=1)          # [Dp, 4Dp]
    b_node = jnp.concatenate(
        [pad_cols(params["bb"]), pad_cols(params["bd"]),
         pad_cols(params["ba"]), pad_cols(params["be"])], axis=1)    # [1, 4Dp]
    wc = pad_w(params["wc"])
    bc = pad_cols(params["bc"])
    gh = pad_cols(params["gh"])
    bh = pad_cols(params["bh"])
    ge = pad_cols(params["ge"])
    bee = pad_cols(params["bee"])

    # Incidence matrices are exactly 0/1 -> bf16 is lossless and halves their bytes.
    Sb = S.astype(jnp.bfloat16)
    Tb = T.astype(jnp.bfloat16)

    inputs = (Xp, EXp_in, Sb, Tb, snorm_n, snorm_e,
              w_node, b_node, wc, bc, gh, bh, ge, bee)
    vmem = pl.BlockSpec(memory_space=pltpu.MemorySpace.VMEM)

    h_pad, e_pad = pl.pallas_call(
        gatedgcn_kernel,
        out_shape=(
            jax.ShapeDtypeStruct((N, Dp), jnp.float32),
            jax.ShapeDtypeStruct((M, Dp), jnp.float32),
        ),
        in_specs=[vmem] * len(inputs),
        out_specs=(vmem, vmem),
        compiler_params=pltpu.CompilerParams(
            # Re-derive per generation for large graphs (v7x: 64 MiB physical).
            vmem_limit_bytes=32 * 1024 * 1024,
        ),
    )(*inputs)

    return h_pad[:, :Dout], e_pad[:, :Dout]


def gatedgcn_ref(X, E_X, S, T, snorm_n, snorm_e, p):
    """Pure-JAX f32 reference matching the PyTorch/DGL forward semantics."""
    AX = X @ p["wa"] + p["ba"]
    BX = X @ p["wb"] + p["bb"]
    DX = X @ p["wd"] + p["bd"]
    EXp = X @ p["we"] + p["be"]
    CE = E_X @ p["wc"] + p["bc"]
    e = CE + S @ DX + T @ EXp
    sig = jax.nn.sigmoid(e)
    H = AX + (T.T @ (sig * (S @ BX))) / (T.T @ sig)
    H = H * snorm_n
    E = e * snorm_e

    def bn(x, g, b):
        m = x.mean(0, keepdims=True)
        v = ((x - m) ** 2).mean(0, keepdims=True)
        return (x - m) / jnp.sqrt(v + BN_EPS) * g + b

    H = X + jnp.maximum(bn(H, p["gh"], p["bh"]), 0.0)
    E = E_X + jnp.maximum(bn(E, p["ge"], p["bee"]), 0.0)
    return H, E


if __name__ == "__main__":
    N, M, D = 16, 32, 32  # nodes, edges, input_dim == output_dim (needed for residual)
    key = jax.random.PRNGKey(0)
    keys = jax.random.split(key, 16)

    X = jax.random.normal(keys[0], (N, D), jnp.float32)
    E_X = jax.random.normal(keys[1], (M, D), jnp.float32)

    # Edge list: first N edges cover every dst node (so every node has in-degree >= 1),
    # remaining edges are random.
    dst = jnp.concatenate(
        [jnp.arange(N, dtype=jnp.int32),
         jax.random.randint(keys[2], (M - N,), 0, N, jnp.int32)])
    src = jax.random.randint(keys[3], (M,), 0, N, jnp.int32)
    S = jax.nn.one_hot(src, N, dtype=jnp.float32)  # [M, N] source incidence
    T = jax.nn.one_hot(dst, N, dtype=jnp.float32)  # [M, N] dest incidence

    snorm_n = jax.random.uniform(keys[4], (N, 1), jnp.float32, 0.1, 1.0)
    snorm_e = jax.random.uniform(keys[5], (M, 1), jnp.float32, 0.1, 1.0)

    # Deterministic parameter init (PyTorch nn.Linear shapes are [out, in]; we pass W^T).
    def linear(k):
        kw, kb = jax.random.split(k)
        bound = 1.0 / jnp.sqrt(D)
        w = jax.random.uniform(kw, (D, D), jnp.float32, -bound, bound)  # already [Din, Dout]
        b = jax.random.uniform(kb, (1, D), jnp.float32, -bound, bound)
        return w, b

    wa, ba = linear(keys[6])
    wb, bb = linear(keys[7])
    wc, bc = linear(keys[8])
    wd, bd = linear(keys[9])
    we, be = linear(keys[10])

    params = dict(
        wa=wa, ba=ba, wb=wb, bb=bb, wc=wc, bc=bc, wd=wd, bd=bd, we=we, be=be,
        gh=jnp.ones((1, D), jnp.float32), bh=jnp.zeros((1, D), jnp.float32),
        ge=jnp.ones((1, D), jnp.float32), bee=jnp.zeros((1, D), jnp.float32),
    )

    H, E = gatedgcn_layer(X, E_X, S, T, snorm_n, snorm_e, params)
    jax.block_until_ready((H, E))

    H_ref, E_ref = gatedgcn_ref(X, E_X, S, T, snorm_n, snorm_e, params)
    # Kernel runs the gather/scatter matmuls on the bf16 MXU path (f32 accumulate) and
    # uses the approximate EUP reciprocal + 1e-6 denominator eps; the 1/sigma inside
    # BatchNorm amplifies that bf16-level drift slightly, hence the 5e-2 tolerance
    # against the exact f32 reference.
    assert jnp.allclose(H, H_ref, rtol=5e-2, atol=5e-2)
    assert jnp.allclose(E, E_ref, rtol=5e-2, atol=5e-2)
    assert bool(jnp.isfinite(H).all()) and bool(jnp.isfinite(E).all())
    print("KERNEL_OK")
</pallas_src>

<mosaic_0001>
module attributes {stable_mosaic.version = 11 : i64} {
  func.func @gatedgcn_kernel(%arg0: memref<16x128xf32, #tpu.memory_space<vmem>>, %arg1: memref<32x128xf32, #tpu.memory_space<vmem>>, %arg2: memref<32x16xbf16, #tpu.memory_space<vmem>>, %arg3: memref<32x16xbf16, #tpu.memory_space<vmem>>, %arg4: memref<16x1xf32, #tpu.memory_space<vmem>>, %arg5: memref<32x1xf32, #tpu.memory_space<vmem>>, %arg6: memref<128x512xf32, #tpu.memory_space<vmem>>, %arg7: memref<1x512xf32, #tpu.memory_space<vmem>>, %arg8: memref<128x128xf32, #tpu.memory_space<vmem>>, %arg9: memref<1x128xf32, #tpu.memory_space<vmem>>, %arg10: memref<1x128xf32, #tpu.memory_space<vmem>>, %arg11: memref<1x128xf32, #tpu.memory_space<vmem>>, %arg12: memref<1x128xf32, #tpu.memory_space<vmem>>, %arg13: memref<1x128xf32, #tpu.memory_space<vmem>>, %arg14: memref<16x128xf32, #tpu.memory_space<vmem>>, %arg15: memref<32x128xf32, #tpu.memory_space<vmem>>) attributes {dimension_semantics = [], scalar_prefetch = 0 : i64, scratch_operands = 0 : i64, tpu.core_type = #tpu.core_type<tc>} {
    %c0 = arith.constant 0 : index
    %c0_0 = arith.constant 0 : index
    %0 = vector.load %arg0[%c0, %c0_0] : memref<16x128xf32, #tpu.memory_space<vmem>>, vector<16x128xf32>
    %c0_1 = arith.constant 0 : index
    %c0_2 = arith.constant 0 : index
    %1 = vector.load %arg1[%c0_1, %c0_2] : memref<32x128xf32, #tpu.memory_space<vmem>>, vector<32x128xf32>
    %c0_3 = arith.constant 0 : index
    %c0_4 = arith.constant 0 : index
    %2 = vector.load %arg2[%c0_3, %c0_4] : memref<32x16xbf16, #tpu.memory_space<vmem>>, vector<32x16xbf16>
    %c0_5 = arith.constant 0 : index
    %c0_6 = arith.constant 0 : index
    %3 = vector.load %arg3[%c0_5, %c0_6] : memref<32x16xbf16, #tpu.memory_space<vmem>>, vector<32x16xbf16>
    %c0_7 = arith.constant 0 : index
    %c0_8 = arith.constant 0 : index
    %4 = vector.load %arg6[%c0_7, %c0_8] : memref<128x512xf32, #tpu.memory_space<vmem>>, vector<128x512xf32>
    %cst = arith.constant dense<0.000000e+00> : vector<16x512xf32>
    %5 = tpu.matmul %0, %4, %cst {dimension_numbers = #tpu.dot_dimension_numbers<[1], [0], [0], [1], [0, 0, 1, 1], [], []>} : vector<16x128xf32>, vector<128x512xf32>, vector<16x512xf32> -> vector<16x512xf32>
    %c0_9 = arith.constant 0 : index
    %c0_10 = arith.constant 0 : index
    %6 = vector.load %arg7[%c0_9, %c0_10] : memref<1x512xf32, #tpu.memory_space<vmem>>, vector<1x512xf32>
    %7 = vector.broadcast %6 : vector<1x512xf32> to vector<16x512xf32>
    %8 = arith.addf %5, %7 : vector<16x512xf32>
    %9 = vector.extract_strided_slice %8 {offsets = [0, 0], sizes = [16, 256], strides = [1, 1]} : vector<16x512xf32> to vector<16x256xf32>
    %10 = vector.extract_strided_slice %8 {offsets = [0, 256], sizes = [16, 128], strides = [1, 1]} : vector<16x512xf32> to vector<16x128xf32>
    %11 = vector.extract_strided_slice %8 {offsets = [0, 384], sizes = [16, 128], strides = [1, 1]} : vector<16x512xf32> to vector<16x128xf32>
    %c0_11 = arith.constant 0 : index
    %c0_12 = arith.constant 0 : index
    %12 = vector.load %arg8[%c0_11, %c0_12] : memref<128x128xf32, #tpu.memory_space<vmem>>, vector<128x128xf32>
    %cst_13 = arith.constant dense<0.000000e+00> : vector<32x128xf32>
    %13 = tpu.matmul %1, %12, %cst_13 {dimension_numbers = #tpu.dot_dimension_numbers<[1], [0], [0], [1], [0, 0, 1, 1], [], []>} : vector<32x128xf32>, vector<128x128xf32>, vector<32x128xf32> -> vector<32x128xf32>
    %c0_14 = arith.constant 0 : index
    %c0_15 = arith.constant 0 : index
    %14 = vector.load %arg9[%c0_14, %c0_15] : memref<1x128xf32, #tpu.memory_space<vmem>>, vector<1x128xf32>
    %15 = vector.broadcast %14 : vector<1x128xf32> to vector<32x128xf32>
    %16 = arith.addf %13, %15 : vector<32x128xf32>
    %17 = arith.truncf %9 : vector<16x256xf32> to vector<16x256xbf16>
    %cst_16 = arith.constant dense<0.000000e+00> : vector<32x256xf32>
    %18 = tpu.matmul %2, %17, %cst_16 {dimension_numbers = #tpu.dot_dimension_numbers<[1], [0], [0], [1], [0, 0, 1, 1], [], []>} : vector<32x16xbf16>, vector<16x256xbf16>, vector<32x256xf32> -> vector<32x256xf32>
    %19 = vector.extract_strided_slice %18 {offsets = [0, 0], sizes = [32, 128], strides = [1, 1]} : vector<32x256xf32> to vector<32x128xf32>
    %20 = vector.extract_strided_slice %18 {offsets = [0, 128], sizes = [32, 128], strides = [1, 1]} : vector<32x256xf32> to vector<32x128xf32>
    %21 = arith.truncf %11 : vector<16x128xf32> to vector<16x128xbf16>
    %cst_17 = arith.constant dense<0.000000e+00> : vector<32x128xf32>
    %22 = tpu.matmul %3, %21, %cst_17 {dimension_numbers = #tpu.dot_dimension_numbers<[1], [0], [0], [1], [0, 0, 1, 1], [], []>} : vector<32x16xbf16>, vector<16x128xbf16>, vector<32x128xf32> -> vector<32x128xf32>
    %23 = arith.addf %16, %20 : vector<32x128xf32>
    %24 = arith.addf %23, %22 : vector<32x128xf32>
    %25 = arith.negf %24 : vector<32x128xf32>
    %26 = math.exp %25 : vector<32x128xf32>
    %cst_18 = arith.constant 1.000000e+00 : f32
    %27 = vector.broadcast %cst_18 : f32 to vector<32x128xf32>
    %28 = arith.addf %27, %26 : vector<32x128xf32>
    %29 = arith.divf %27, %28 : vector<32x128xf32>
    %30 = arith.mulf %29, %19 : vector<32x128xf32>
    %31 = tpu.concatenate %30, %29 in 1 : vector<32x128xf32>, vector<32x128xf32> -> vector<32x256xf32>
    %32 = arith.truncf %31 : vector<32x256xf32> to vector<32x256xbf16>
    %cst_19 = arith.constant dense<0.000000e+00> : vector<16x256xf32>
    %33 = tpu.matmul %3, %32, %cst_19 {dimension_numbers = #tpu.dot_dimension_numbers<[0], [0], [1], [1], [0, 1, 1, 1], [], []>} : vector<32x16xbf16>, vector<32x256xbf16>, vector<16x256xf32> -> vector<16x256xf32>
    %34 = vector.extract_strided_slice %33 {offsets = [0, 0], sizes = [16, 128], strides = [1, 1]} : vector<16x256xf32> to vector<16x128xf32>
    %35 = vector.extract_strided_slice %33 {offsets = [0, 128], sizes = [16, 128], strides = [1, 1]} : vector<16x256xf32> to vector<16x128xf32>
    %cst_20 = arith.constant 9.99999997E-7 : f32
    %36 = vector.broadcast %cst_20 : f32 to vector<16x128xf32>
    %37 = arith.addf %35, %36 : vector<16x128xf32>
    %38 = tpu.reciprocal %37 {approx = true} : vector<16x128xf32> -> vector<16x128xf32>
    %39 = arith.mulf %34, %38 : vector<16x128xf32>
    %40 = arith.addf %10, %39 : vector<16x128xf32>
    %c0_21 = arith.constant 0 : index
    %c0_22 = arith.constant 0 : index
    %41 = vector.load %arg4[%c0_21, %c0_22] : memref<16x1xf32, #tpu.memory_space<vmem>>, vector<16x1xf32>
    %42 = vector.broadcast %41 : vector<16x1xf32> to vector<16x128xf32>
    %43 = arith.mulf %40, %42 : vector<16x128xf32>
    %c0_23 = arith.constant 0 : index
    %c0_24 = arith.constant 0 : index
    %44 = vector.load %arg5[%c0_23, %c0_24] : memref<32x1xf32, #tpu.memory_space<vmem>>, vector<32x1xf32>
    %45 = vector.broadcast %44 : vector<32x1xf32> to vector<32x128xf32>
    %46 = arith.mulf %24, %45 : vector<32x128xf32>
    %c0_25 = arith.constant 0 : index
    %c0_26 = arith.constant 0 : index
    %47 = vector.load %arg10[%c0_25, %c0_26] : memref<1x128xf32, #tpu.memory_space<vmem>>, vector<1x128xf32>
    %c0_27 = arith.constant 0 : index
    %c0_28 = arith.constant 0 : index
    %48 = vector.load %arg11[%c0_27, %c0_28] : memref<1x128xf32, #tpu.memory_space<vmem>>, vector<1x128xf32>
    %cst_29 = arith.constant dense<0.000000e+00> : vector<128xf32>
    %49 = vector.multi_reduction <add>, %43, %cst_29 [0] : vector<16x128xf32> to vector<128xf32>
    %50 = vector.shape_cast %49 : vector<128xf32> to vector<1x128xf32>
    %cst_30 = arith.constant 1.600000e+01 : f32
    %51 = vector.broadcast %cst_30 : f32 to vector<1x128xf32>
    %52 = arith.divf %50, %51 : vector<1x128xf32>
    %53 = vector.broadcast %52 : vector<1x128xf32> to vector<16x128xf32>
    %54 = arith.subf %43, %53 : vector<16x128xf32>
    %55 = arith.mulf %54, %54 : vector<16x128xf32>
    %cst_31 = arith.constant dense<0.000000e+00> : vector<128xf32>
    %56 = vector.multi_reduction <add>, %55, %cst_31 [0] : vector<16x128xf32> to vector<128xf32>
    %57 = vector.shape_cast %56 : vector<128xf32> to vector<1x128xf32>
    %cst_32 = arith.constant 1.600000e+01 : f32
    %58 = vector.broadcast %cst_32 : f32 to vector<1x128xf32>
    %59 = arith.divf %57, %58 : vector<1x128xf32>
    %60 = vector.broadcast %52 : vector<1x128xf32> to vector<16x128xf32>
    %61 = arith.subf %43, %60 : vector<16x128xf32>
    %cst_33 = arith.constant 9.99999974E-6 : f32
    %62 = vector.broadcast %cst_33 : f32 to vector<1x128xf32>
    %63 = arith.addf %59, %62 : vector<1x128xf32>
    %64 = math.rsqrt %63 : vector<1x128xf32>
    %65 = vector.broadcast %64 : vector<1x128xf32> to vector<16x128xf32>
    %66 = arith.mulf %61, %65 : vector<16x128xf32>
    %67 = vector.broadcast %47 : vector<1x128xf32> to vector<16x128xf32>
    %68 = arith.mulf %66, %67 : vector<16x128xf32>
    %69 = vector.broadcast %48 : vector<1x128xf32> to vector<16x128xf32>
    %70 = arith.addf %68, %69 : vector<16x128xf32>
    %cst_34 = arith.constant 0.000000e+00 : f32
    %71 = vector.broadcast %cst_34 : f32 to vector<16x128xf32>
    %72 = arith.maximumf %70, %71 : vector<16x128xf32>
    %73 = arith.addf %0, %72 : vector<16x128xf32>
    %c0_35 = arith.constant 0 : index
    %c0_36 = arith.constant 0 : index
    %74 = vector.load %arg14[%c0_35, %c0_36] : memref<16x128xf32, #tpu.memory_space<vmem>>, vector<16x128xf32>
    tpu.vector_store %arg14[%c0_35, %c0_36], %73 {strides = array<i32>} : memref<16x128xf32, #tpu.memory_space<vmem>>, vector<16x128xf32>,
    %c0_37 = arith.constant 0 : index
    %c0_38 = arith.constant 0 : index
    %75 = vector.load %arg12[%c0_37, %c0_38] : memref<1x128xf32, #tpu.memory_space<vmem>>, vector<1x128xf32>
    %c0_39 = arith.constant 0 : index
    %c0_40 = arith.constant 0 : index
    %76 = vector.load %arg13[%c0_39, %c0_40] : memref<1x128xf32, #tpu.memory_space<vmem>>, vector<1x128xf32>
    %cst_41 = arith.constant dense<0.000000e+00> : vector<128xf32>
    %77 = vector.multi_reduction <add>, %46, %cst_41 [0] : vector<32x128xf32> to vector<128xf32>
    %78 = vector.shape_cast %77 : vector<128xf32> to vector<1x128xf32>
    %cst_42 = arith.constant 3.200000e+01 : f32
    %79 = vector.broadcast %cst_42 : f32 to vector<1x128xf32>
    %80 = arith.divf %78, %79 : vector<1x128xf32>
    %81 = vector.broadcast %80 : vector<1x128xf32> to vector<32x128xf32>
    %82 = arith.subf %46, %81 : vector<32x128xf32>
    %83 = arith.mulf %82, %82 : vector<32x128xf32>
    %cst_43 = arith.constant dense<0.000000e+00> : vector<128xf32>
    %84 = vector.multi_reduction <add>, %83, %cst_43 [0] : vector<32x128xf32> to vector<128xf32>
    %85 = vector.shape_cast %84 : vector<128xf32> to vector<1x128xf32>
    %cst_44 = arith.constant 3.200000e+01 : f32
    %86 = vector.broadcast %cst_44 : f32 to vector<1x128xf32>
    %87 = arith.divf %85, %86 : vector<1x128xf32>
    %88 = vector.broadcast %80 : vector<1x128xf32> to vector<32x128xf32>
    %89 = arith.subf %46, %88 : vector<32x128xf32>
    %cst_45 = arith.constant 9.99999974E-6 : f32
    %90 = vector.broadcast %cst_45 : f32 to vector<1x128xf32>
    %91 = arith.addf %87, %90 : vector<1x128xf32>
    %92 = math.rsqrt %91 : vector<1x128xf32>
    %93 = vector.broadcast %92 : vector<1x128xf32> to vector<32x128xf32>
    %94 = arith.mulf %89, %93 : vector<32x128xf32>
    %95 = vector.broadcast %75 : vector<1x128xf32> to vector<32x128xf32>
    %96 = arith.mulf %94, %95 : vector<32x128xf32>
    %97 = vector.broadcast %76 : vector<1x128xf32> to vector<32x128xf32>
    %98 = arith.addf %96, %97 : vector<32x128xf32>
    %cst_46 = arith.constant 0.000000e+00 : f32
    %99 = vector.broadcast %cst_46 : f32 to vector<32x128xf32>
    %100 = arith.maximumf %98, %99 : vector<32x128xf32>
    %101 = arith.addf %1, %100 : vector<32x128xf32>
    %c0_47 = arith.constant 0 : index
    %c0_48 = arith.constant 0 : index
    %102 = vector.load %arg15[%c0_47, %c0_48] : memref<32x128xf32, #tpu.memory_space<vmem>>, vector<32x128xf32>
    tpu.vector_store %arg15[%c0_47, %c0_48], %101 {strides = array<i32>} : memref<32x128xf32, #tpu.memory_space<vmem>>, vector<32x128xf32>,
    return
  }
}

</mosaic_0001>

<llo_original>
// kernel: tpu_custom_call.1
$region0: #{tpu_custom_call.1}
  #allocation0 [shape = 'u32[]', space=smem, size = 0x4, offset = 0x4, fixed_abs, tag = 'smem constant byte address 0x4 - core index']
  #allocation1 [shape = 'u32[144,128]{1,0:T(1,128)}', space=vmem, size = 0x12000, scoped, tag = 'internal scratch']
  %s0 = inlined_call_operand.hbm [shape: f32[16,128], index: 0, kind: input, shape index: {}]
  %s1 = inlined_call_operand.hbm [shape: f32[32,128], index: 1, kind: input, shape index: {}]
  %s2 = inlined_call_operand.vmem [shape: bf16[32,16], index: 2, kind: input, shape index: {}]
  %s3 = inlined_call_operand.vmem [shape: bf16[32,16], index: 3, kind: input, shape index: {}]
  %s4 = inlined_call_operand.vmem [shape: f32[16,1], index: 4, kind: input, shape index: {}]
  %s5 = inlined_call_operand.vmem [shape: f32[32,1], index: 5, kind: input, shape index: {}]
  %s6 = inlined_call_operand.hbm [shape: f32[128,512], index: 6, kind: input, shape index: {}]
  %s7 = inlined_call_operand.hbm [shape: f32[1,512], index: 7, kind: input, shape index: {}]
  %s8 = inlined_call_operand.vmem [shape: f32[128,128], index: 8, kind: input, shape index: {}]
  %s9 = inlined_call_operand.vmem [shape: f32[1,128], index: 9, kind: input, shape index: {}]
  %s10 = inlined_call_operand.vmem [shape: f32[1,128], index: 10, kind: input, shape index: {}]
  %s11 = inlined_call_operand.vmem [shape: f32[1,128], index: 11, kind: input, shape index: {}]
  %s12 = inlined_call_operand.vmem [shape: f32[1,128], index: 12, kind: input, shape index: {}]
  %s13 = inlined_call_operand.vmem [shape: f32[1,128], index: 13, kind: input, shape index: {}]
  %s14 = inlined_call_operand.hbm [shape: f32[16,128], index: 14, kind: output, shape index: {0}]
  %s15 = inlined_call_operand.hbm [shape: f32[32,128], index: 15, kind: output, shape index: {1}]
  %16 = xla_tuple %s14, %s15
  %s17 = sld [smem:[#allocation0]]
  $region90: #{tpu_custom_call.1} parent=0
    _
  %s19 = ssub.s32 1, %s17
  %s20 = scalar_select 0, %s19, %s17
  $region1: #{tpu_custom_call.1} parent=0
    #allocation2 [shape = 'u8[8192]{0}', space=vmem, size = 0x2000, scoped, tag = 'input window, operand 0, single buffered']
    #allocation3 [shape = 's32[1]{0}', space=sflag, size = 0x4, scoped, tag = 'scoped memory for tpu_custom_call.1']
    #allocation4 [shape = 's32[1]{0}', space=sflag, size = 0x4, scoped, tag = 'scoped memory for tpu_custom_call.1']
    #allocation5 [shape = 'u8[16384]{0}', space=vmem, size = 0x4000, scoped, tag = 'input window, operand 1, single buffered']
    #allocation6 [shape = 's32[1]{0}', space=sflag, size = 0x4, scoped, tag = 'scoped memory for tpu_custom_call.1']
    #allocation7 [shape = 'u8[262144]{0}', space=vmem, size = 0x40000, scoped, tag = 'input window, operand 6, single buffered']
    #allocation8 [shape = 'u8[2048]{0}', space=vmem, size = 0x800, scoped, tag = 'input window, operand 7, single buffered']
    #allocation9 [shape = 's32[1]{0}', space=sflag, size = 0x4, scoped, tag = 'scoped memory for tpu_custom_call.1']
    #allocation10 [shape = 'u8[8192]{0}', space=vmem, size = 0x2000, scoped, tag = 'output window, operand 0, single buffered']
    #allocation11 [shape = 'u8[16384]{0}', space=vmem, size = 0x4000, scoped, tag = 'output window, operand 1, single buffered']
    #allocation12 [shape = 's32[1]{0}', space=sflag, size = 0x4, scoped, tag = 'scoped memory for tpu_custom_call.1']
    %21 = vsyncpa [#allocation3], 0
    %22 = vsyncpa [#allocation6], 0
    %23 = vsyncpa [#allocation9], 0
    %24 = vsyncpa [#allocation4], 0
    %25 = vsyncpa [#allocation12], 0
    // Predicated region
    $region2: #{tpu_custom_call.1} parent=1 // pred_check
      _
    $region3: #{tpu_custom_call.1} parent=1 // pred_check_branch
      %27 = sbr.rel (0) target = $region5
    $region4: #{tpu_custom_call.1} parent=1 // pred_region
      %s29 = ssub.s32 256, 256
      %30 = vsyncadd [#allocation3], %s29
      %s31 = sshll.u32 [#allocation2], 4
      %s32 = int_to_ptr.vmem [resolvable:$true] %s31
      %37 = dma.hbm_to_vmem [thread:$0]  %s0, 256, %s32, [#allocation3], 128, 128, 8
    $region5: #{tpu_custom_call.1} parent=1 // pred_fallthru
      _
    // Predicated region
    $region6: #{tpu_custom_call.1} parent=1 // pred_check
      _
    $region7: #{tpu_custom_call.1} parent=1 // pred_check_branch
      %39 = sbr.rel (0) target = $region9
    $region8: #{tpu_custom_call.1} parent=1 // pred_region
      %s41 = ssub.s32 512, 512
      %42 = vsyncadd [#allocation6], %s41
      %s43 = sshll.u32 [#allocation5], 4
      %s44 = int_to_ptr.vmem [resolvable:$true] %s43
      %49 = dma.hbm_to_vmem [thread:$0]  %s1, 512, %s44, [#allocation6], 128, 128, 8
    $region9: #{tpu_custom_call.1} parent=1 // pred_fallthru
      _
    // Predicated region
    $region10: #{tpu_custom_call.1} parent=1 // pred_check
      _
    $region11: #{tpu_custom_call.1} parent=1 // pred_check_branch
      %51 = sbr.rel (0) target = $region13
    $region12: #{tpu_custom_call.1} parent=1 // pred_region
      _
    $region13: #{tpu_custom_call.1} parent=1 // pred_fallthru
      _
    // Predicated region
    $region14: #{tpu_custom_call.1} parent=1 // pred_check
      _
    $region15: #{tpu_custom_call.1} parent=1 // pred_check_branch
      %53 = sbr.rel (0) target = $region17
    $region16: #{tpu_custom_call.1} parent=1 // pred_region
      _
    $region17: #{tpu_custom_call.1} parent=1 // pred_fallthru
      _
    // Predicated region
    $region18: #{tpu_custom_call.1} parent=1 // pred_check
      _
    $region19: #{tpu_custom_call.1} parent=1 // pred_check_branch
      %55 = sbr.rel (0) target = $region21
    $region20: #{tpu_custom_call.1} parent=1 // pred_region
      _
    $region21: #{tpu_custom_call.1} parent=1 // pred_fallthru
      _
    // Predicated region
    $region22: #{tpu_custom_call.1} parent=1 // pred_check
      _
    $region23: #{tpu_custom_call.1} parent=1 // pred_check_branch
      %57 = sbr.rel (0) target = $region25
    $region24: #{tpu_custom_call.1} parent=1 // pred_region
      _
    $region25: #{tpu_custom_call.1} parent=1 // pred_fallthru
      _
    // Predicated region
    $region26: #{tpu_custom_call.1} parent=1 // pred_check
      _
    $region27: #{tpu_custom_call.1} parent=1 // pred_check_branch
      %59 = sbr.rel (0) target = $region29
    $region28: #{tpu_custom_call.1} parent=1 // pred_region
      %s61 = ssub.s32 8192, 8192
      %62 = vsyncadd [#allocation6], %s61
      %s63 = sshll.u32 [#allocation7], 4
      %s64 = int_to_ptr.vmem [resolvable:$true] %s63
      %69 = dma.hbm_to_vmem [thread:$0]  %s6, 8192, %s64, [#allocation6], 512, 512, 32
    $region29: #{tpu_custom_call.1} parent=1 // pred_fallthru
      _
    // Predicated region
    $region30: #{tpu_custom_call.1} parent=1 // pred_check
      _
    $region31: #{tpu_custom_call.1} parent=1 // pred_check_branch
      %71 = sbr.rel (0) target = $region33
    $region32: #{tpu_custom_call.1} parent=1 // pred_region
      %s73 = ssub.s32 64, 64
      %74 = vsyncadd [#allocation9], %s73
      %s76 = sshll.u32 [#allocation8], 4
      %s77 = int_to_ptr.vmem [resolvable:$true] %s76
      %79 = dma.hbm_to_vmem [thread:$0]  %s7, 64, %s77, [#allocation9]
    $region33: #{tpu_custom_call.1} parent=1 // pred_fallthru
      _
    // Predicated region
    $region34: #{tpu_custom_call.1} parent=1 // pred_check
      _
    $region35: #{tpu_custom_call.1} parent=1 // pred_check_branch
      %81 = sbr.rel (0) target = $region37
    $region36: #{tpu_custom_call.1} parent=1 // pred_region
      _
    $region37: #{tpu_custom_call.1} parent=1 // pred_fallthru
      _
    // Predicated region
    $region38: #{tpu_custom_call.1} parent=1 // pred_check
      _
    $region39: #{tpu_custom_call.1} parent=1 // pred_check_branch
      %83 = sbr.rel (0) target = $region41
    $region40: #{tpu_custom_call.1} parent=1 // pred_region
      _
    $region41: #{tpu_custom_call.1} parent=1 // pred_fallthru
      _
    // Predicated region
    $region42: #{tpu_custom_call.1} parent=1 // pred_check
      _
    $region43: #{tpu_custom_call.1} parent=1 // pred_check_branch
      %85 = sbr.rel (0) target = $region45
    $region44: #{tpu_custom_call.1} parent=1 // pred_region
      _
    $region45: #{tpu_custom_call.1} parent=1 // pred_fallthru
      _
    // Predicated region
    $region46: #{tpu_custom_call.1} parent=1 // pred_check
      _
    $region47: #{tpu_custom_call.1} parent=1 // pred_check_branch
      %87 = sbr.rel (0) target = $region49
    $region48: #{tpu_custom_call.1} parent=1 // pred_region
      _
    $region49: #{tpu_custom_call.1} parent=1 // pred_fallthru
      _
    // Predicated region
    $region50: #{tpu_custom_call.1} parent=1 // pred_check
      _
    $region51: #{tpu_custom_call.1} parent=1 // pred_check_branch
      %89 = sbr.rel (0) target = $region53
    $region52: #{tpu_custom_call.1} parent=1 // pred_region
      _
    $region53: #{tpu_custom_call.1} parent=1 // pred_fallthru
      _
    // Predicated region
    $region54: #{tpu_custom_call.1} parent=1 // pred_check
      _
    $region55: #{tpu_custom_call.1} parent=1 // pred_check_branch
      %91 = sbr.rel (0) target = $region57
    $region56: #{tpu_custom_call.1} parent=1 // pred_region
      _
    $region57: #{tpu_custom_call.1} parent=1 // pred_fallthru
      _
    // Predicated region
    $region58: #{tpu_custom_call.1} parent=1 // pred_check
      _
    $region59: #{tpu_custom_call.1} parent=1 // pred_check_branch
      %93 = sbr.rel (0) target = $region61
    $region60: #{tpu_custom_call.1} parent=1 // pred_region
      %94 = dma.done [#allocation3], 256
    $region61: #{tpu_custom_call.1} parent=1 // pred_fallthru
      _
    // Predicated region
    $region62: #{tpu_custom_call.1} parent=1 // pred_check
      _
    $region63: #{tpu_custom_call.1} parent=1 // pred_check_branch
      %96 = sbr.rel (0) target = $region65
    $region64: #{tpu_custom_call.1} parent=1 // pred_region
      %97 = dma.done [#allocation6], 512
    $region65: #{tpu_custom_call.1} parent=1 // pred_fallthru
      _
    // Predicated region
    $region66: #{tpu_custom_call.1} parent=1 // pred_check
      _
    $region67: #{tpu_custom_call.1} parent=1 // pred_check_branch
      %99 = sbr.rel (0) target = $region69
    $region68: #{tpu_custom_call.1} parent=1 // pred_region
      %100 = dma.done [#allocation6], 8192
    $region69: #{tpu_custom_call.1} parent=1 // pred_fallthru
      _
    // Predicated region
    $region70: #{tpu_custom_call.1} parent=1 // pred_check
      _
    $region71: #{tpu_custom_call.1} parent=1 // pred_check_branch
      %102 = sbr.rel (0) target = $region73
    $region72: #{tpu_custom_call.1} parent=1 // pred_region
      %103 = dma.done [#allocation9], 64
    $region73: #{tpu_custom_call.1} parent=1 // pred_fallthru
      _
    %v105 = vld [vmem:[#allocation2] sm:$0xff]
    %v106 = vld [vmem:[#allocation2 + $0x8] sm:$0xff]
    %v107 = vld [vmem:[#allocation5] sm:$0xff]
    %v108 = vld [vmem:[#allocation5 + $0x8] sm:$0xff]
    %v109 = vld [vmem:[#allocation5 + $0x10] sm:$0xff]
    %v110 = vld [vmem:[#allocation5 + $0x18] sm:$0xff]
    %v111 = vld [vmem:[%s2] sm:$0xf]
    %v112 = vld [vmem:[%s2 + $0x4] sm:$0xf]
    %v113 = vld [vmem:[%s2 + $0x8] sm:$0xf]
    %v114 = vld [vmem:[%s2 + $0xc] sm:$0xf]
    %v115 = vld [vmem:[%s3] sm:$0xf]
    %v116 = vld [vmem:[%s3 + $0x4] sm:$0xf]
    %v117 = vld [vmem:[%s3 + $0x8] sm:$0xf]
    %v118 = vld [vmem:[%s3 + $0xc] sm:$0xf]
    %v119 = vld [vmem:[#allocation7] sm:$0xff]
    %v120 = vld [vmem:[#allocation7 + $0x8] sm:$0xff]
    %v121 = vld [vmem:[#allocation7 + $0x10] sm:$0xff]
    %v122 = vld [vmem:[#allocation7 + $0x18] sm:$0xff]
    %v123 = vld [vmem:[#allocation7 + $0x20] sm:$0xff]
    %v124 = vld [vmem:[#allocation7 + $0x28] sm:$0xff]
    %v125 = vld [vmem:[#allocation7 + $0x30] sm:$0xff]
    %v126 = vld [vmem:[#allocation7 + $0x38] sm:$0xff]
    %v127 = vld [vmem:[#allocation7 + $0x40] sm:$0xff]
    %v128 = vld [vmem:[#allocation7 + $0x48] sm:$0xff]
    %v129 = vld [vmem:[#allocation7 + $0x50] sm:$0xff]
    %v130 = vld [vmem:[#allocation7 + $0x58] sm:$0xff]
    %v131 = vld [vmem:[#allocation7 + $0x60] sm:$0xff]
    %v132 = vld [vmem:[#allocation7 + $0x68] sm:$0xff]
    %v133 = vld [vmem:[#allocation7 + $0x70] sm:$0xff]
    %v134 = vld [vmem:[#allocation7 + $0x78] sm:$0xff]
    %v135 = vld [vmem:[#allocation7 + $0x80] sm:$0xff]
    %v136 = vld [vmem:[#allocation7 + $0x88] sm:$0xff]
    %v137 = vld [vmem:[#allocation7 + $0x90] sm:$0xff]
    %v138 = vld [vmem:[#allocation7 + $0x98] sm:$0xff]
    %v139 = vld [vmem:[#allocation7 + $0xa0] sm:$0xff]
    %v140 = vld [vmem:[#allocation7 + $0xa8] sm:$0xff]
    %v141 = vld [vmem:[#allocation7 + $0xb0] sm:$0xff]
    %v142 = vld [vmem:[#allocation7 + $0xb8] sm:$0xff]
    %v143 = vld [vmem:[#allocation7 + $0xc0] sm:$0xff]
    %v144 = vld [vmem:[#allocation7 + $0xc8] sm:$0xff]
    %v145 = vld [vmem:[#allocation7 + $0xd0] sm:$0xff]
    %v146 = vld [vmem:[#allocation7 + $0xd8] sm:$0xff]
    %v147 = vld [vmem:[#allocation7 + $0xe0] sm:$0xff]
    %v148 = vld [vmem:[#allocation7 + $0xe8] sm:$0xff]
    %v149 = vld [vmem:[#allocation7 + $0xf0] sm:$0xff]
    %v150 = vld [vmem:[#allocation7 + $0xf8] sm:$0xff]
    %v151 = vld [vmem:[#allocation7 + $0x100] sm:$0xff]
    %v152 = vld [vmem:[#allocation7 + $0x108] sm:$0xff]
    %v153 = vld [vmem:[#allocation7 + $0x110] sm:$0xff]
    %v154 = vld [vmem:[#allocation7 + $0x118] sm:$0xff]
    %v155 = vld [vmem:[#allocation7 + $0x120] sm:$0xff]
    %v156 = vld [vmem:[#allocation7 + $0x128] sm:$0xff]
    %v157 = vld [vmem:[#allocation7 + $0x130] sm:$0xff]
    %v158 = vld [vmem:[#allocation7 + $0x138] sm:$0xff]
    %v159 = vld [vmem:[#allocation7 + $0x140] sm:$0xff]
    %v160 = vld [vmem:[#allocation7 + $0x148] sm:$0xff]
    %v161 = vld [vmem:[#allocation7 + $0x150] sm:$0xff]
    %v162 = vld [vmem:[#allocation7 + $0x158] sm:$0xff]
    %v163 = vld [vmem:[#allocation7 + $0x160] sm:$0xff]
    %v164 = vld [vmem:[#allocation7 + $0x168] sm:$0xff]
    %v165 = vld [vmem:[#allocation7 + $0x170] sm:$0xff]
    %v166 = vld [vmem:[#allocation7 + $0x178] sm:$0xff]
    %v167 = vld [vmem:[#allocation7 + $0x180] sm:$0xff]
    %v168 = vld [vmem:[#allocation7 + $0x188] sm:$0xff]
    %v169 = vld [vmem:[#allocation7 + $0x190] sm:$0xff]
    %v170 = vld [vmem:[#allocation7 + $0x198] sm:$0xff]
    %v171 = vld [vmem:[#allocation7 + $0x1a0] sm:$0xff]
    %v172 = vld [vmem:[#allocation7 + $0x1a8] sm:$0xff]
    %v173 = vld [vmem:[#allocation7 + $0x1b0] sm:$0xff]
    %v174 = vld [vmem:[#allocation7 + $0x1b8] sm:$0xff]
    %v175 = vld [vmem:[#allocation7 + $0x1c0] sm:$0xff]
    %v176 = vld [vmem:[#allocation7 + $0x1c8] sm:$0xff]
    %v177 = vld [vmem:[#allocation7 + $0x1d0] sm:$0xff]
    %v178 = vld [vmem:[#allocation7 + $0x1d8] sm:$0xff]
    %v179 = vld [vmem:[#allocation7 + $0x1e0] sm:$0xff]
    %v180 = vld [vmem:[#allocation7 + $0x1e8] sm:$0xff]
    %v181 = vld [vmem:[#allocation7 + $0x1f0] sm:$0xff]
    %v182 = vld [vmem:[#allocation7 + $0x1f8] sm:$0xff]
    %v183 = vld [vmem:[#allocation8] sm:$0xf]
    %v185 = vlaneseq
    %v186 = vshrl.u32 %v185, 7
    %v187 = vsub.s32 0, %v186
    %v188 = vrot.slane %v183, %v187
    %v189 = vlaneseq
    %v190 = vshrl.u32 %v189, 7
    %v191 = vsub.s32 1, %v190
    %v192 = vrot.slane %v183, %v191
    %v193 = vlaneseq
    %v194 = vshrl.u32 %v193, 7
    %v195 = vsub.s32 2, %v194
    %v196 = vrot.slane %v183, %v195
    %v197 = vlaneseq
    %v198 = vshrl.u32 %v197, 7
    %v199 = vsub.s32 3, %v198
    %v200 = vrot.slane %v183, %v199
    %205 = vmatprep.subr.mxu0 %v120
    %206 = vmatpush1.msra.mxu0 %v119
    %207 = vmatprep.subr.mxu0 %v124
    %208 = vmatpush1.msra.mxu0 %v123
    %209 = vmatprep.subr.mxu0 %v128
    %210 = vmatpush1.msra.mxu0 %v127
    %211 = vmatprep.subr.mxu0 %v132
    %212 = vmatpush1.msra.mxu0 %v131
    %213 = vmatprep.subr.mxu0 %v136
    %214 = vmatpush1.msra.mxu0 %v135
    %215 = vmatprep.subr.mxu0 %v140
    %216 = vmatpush1.msra.mxu0 %v139
    %217 = vmatprep.subr.mxu0 %v144
    %218 = vmatpush1.msra.mxu0 %v143
    %219 = vmatprep.subr.mxu0 %v148
    %220 = vmatpush1.msra.mxu0 %v147
    %221 = vmatprep.subr.mxu0 %v152
    %222 = vmatpush1.msra.mxu0 %v151
    %223 = vmatprep.subr.mxu0 %v156
    %224 = vmatpush1.msra.mxu0 %v155
    %225 = vmatprep.subr.mxu0 %v160
    %226 = vmatpush1.msra.mxu0 %v159
    %227 = vmatprep.subr.mxu0 %v164
    %228 = vmatpush1.msra.mxu0 %v163
    %229 = vmatprep.subr.mxu0 %v168
    %230 = vmatpush1.msra.mxu0 %v167
    %231 = vmatprep.subr.mxu0 %v172
    %232 = vmatpush1.msra.mxu0 %v171
    %233 = vmatprep.subr.mxu0 %v176
    %234 = vmatpush1.msra.mxu0 %v175
    %235 = vmatprep.subr.mxu0 %v180
    %236 = vmatpush1.msra.mxu0 %v179
    %237 = vmatprep.subr.mxu0 0.0
    %238 = vmatpush1.msra.mxu0 0.0
    %239 = vmatprep.subr.mxu0 0.0
    %240 = vmatpush1.msra.mxu0 0.0
    %241 = vmatprep.subr.mxu0 0.0
    %242 = vmatpush1.msra.mxu0 0.0
    %243 = vmatprep.subr.mxu0 0.0
    %244 = vmatpush1.msra.mxu0 0.0
    %245 = vmatprep.subr.mxu0 0.0
    %246 = vmatpush1.msra.mxu0 0.0
    %247 = vmatprep.subr.mxu0 0.0
    %248 = vmatpush1.msra.mxu0 0.0
    %249 = vmatprep.subr.mxu0 0.0
    %250 = vmatpush1.msra.mxu0 0.0
    %251 = vmatprep.subr.mxu0 0.0
    %252 = vmatpush1.msra.mxu0 0.0
    %253 = vmatprep.subr.mxu0 0.0
    %254 = vmatpush1.msra.mxu0 0.0
    %255 = vmatprep.subr.mxu0 0.0
    %256 = vmatpush1.msra.mxu0 0.0
    %257 = vmatprep.subr.mxu0 0.0
    %258 = vmatpush1.msra.mxu0 0.0
    %259 = vmatprep.subr.mxu0 0.0
    %260 = vmatpush1.msra.mxu0 0.0
    %261 = vmatprep.subr.mxu0 0.0
    %262 = vmatpush1.msra.mxu0 0.0
    %263 = vmatprep.subr.mxu0 0.0
    %264 = vmatpush1.msra.mxu0 0.0
    %265 = vmatprep.subr.mxu0 0.0
    %266 = vmatpush1.msra.mxu0 0.0
    %267 = vmatprep.subr.mxu0 0.0
    %268 = vmatpush1.msra.mxu0 0.0
    %269 = vmatprep.mubr.f32.mxu0 0.0
    %270 = vmatmul.mubr.f32.gmra.mrb[0].mxu0 %v105
    %v271 = vpop.f32.mrb[0].mxu0
    %v272 = vadd.f32 %v188, %v271
    %v273 = vpop.f32.mrb[0].mxu0
    %v274 = vadd.f32 %v192, %v273
    %275 = vmatprep.mubr.f32.mxu0 0.0
    %276 = vmatmul.mubr.f32.gmra.mrb[0].mxu0 %v106
    %v277 = vpop.f32.mrb[0].mxu0
    %v278 = vadd.f32 %v188, %v277
    %v279 = vpop.f32.mrb[0].mxu0
    %v280 = vadd.f32 %v192, %v279
    %281 = vdwg.mxu0
    %282 = vmatprep.subr.mxu0 %v122
    %283 = vmatpush1.msra.mxu0 %v121
    %284 = vmatprep.subr.mxu0 %v126
    %285 = vmatpush1.msra.mxu0 %v125
    %286 = vmatprep.subr.mxu0 %v130
    %287 = vmatpush1.msra.mxu0 %v129
    %288 = vmatprep.subr.mxu0 %v134
    %289 = vmatpush1.msra.mxu0 %v133
    %290 = vmatprep.subr.mxu0 %v138
    %291 = vmatpush1.msra.mxu0 %v137
    %292 = vmatprep.subr.mxu0 %v142
    %293 = vmatpush1.msra.mxu0 %v141
    %294 = vmatprep.subr.mxu0 %v146
    %295 = vmatpush1.msra.mxu0 %v145
    %296 = vmatprep.subr.mxu0 %v150
    %297 = vmatpush1.msra.mxu0 %v149
    %298 = vmatprep.subr.mxu0 %v154
    %299 = vmatpush1.msra.mxu0 %v153
    %300 = vmatprep.subr.mxu0 %v158
    %301 = vmatpush1.msra.mxu0 %v157
    %302 = vmatprep.subr.mxu0 %v162
    %303 = vmatpush1.msra.mxu0 %v161
    %304 = vmatprep.subr.mxu0 %v166
    %305 = vmatpush1.msra.mxu0 %v165
    %306 = vmatprep.subr.mxu0 %v170
    %307 = vmatpush1.msra.mxu0 %v169
    %308 = vmatprep.subr.mxu0 %v174
    %309 = vmatpush1.msra.mxu0 %v173
    %310 = vmatprep.subr.mxu0 %v178
    %311 = vmatpush1.msra.mxu0 %v177
    %312 = vmatprep.subr.mxu0 %v182
    %313 = vmatpush1.msra.mxu0 %v181
    %314 = vmatprep.subr.mxu0 0.0
    %315 = vmatpush1.msra.mxu0 0.0
    %316 = vmatprep.subr.mxu0 0.0
    %317 = vmatpush1.msra.mxu0 0.0
    %318 = vmatprep.subr.mxu0 0.0
    %319 = vmatpush1.msra.mxu0 0.0
    %320 = vmatprep.subr.mxu0 0.0
    %321 = vmatpush1.msra.mxu0 0.0
    %322 = vmatprep.subr.mxu0 0.0
    %323 = vmatpush1.msra.mxu0 0.0
    %324 = vmatprep.subr.mxu0 0.0
    %325 = vmatpush1.msra.mxu0 0.0
    %326 = vmatprep.subr.mxu0 0.0
    %327 = vmatpush1.msra.mxu0 0.0
    %328 = vmatprep.subr.mxu0 0.0
    %329 = vmatpush1.msra.mxu0 0.0
    %330 = vmatprep.subr.mxu0 0.0
    %331 = vmatpush1.msra.mxu0 0.0
    %332 = vmatprep.subr.mxu0 0.0
    %333 = vmatpush1.msra.mxu0 0.0
    %334 = vmatprep.subr.mxu0 0.0
    %335 = vmatpush1.msra.mxu0 0.0
    %336 = vmatprep.subr.mxu0 0.0
    %337 = vmatpush1.msra.mxu0 0.0
    %338 = vmatprep.subr.mxu0 0.0
    %339 = vmatpush1.msra.mxu0 0.0
    %340 = vmatprep.subr.mxu0 0.0
    %341 = vmatpush1.msra.mxu0 0.0
    %342 = vmatprep.subr.mxu0 0.0
    %343 = vmatpush1.msra.mxu0 0.0
    %344 = vmatprep.subr.mxu0 0.0
    %345 = vmatpush1.msra.mxu0 0.0
    %346 = vmatprep.mubr.f32.mxu0 0.0
    %347 = vmatmul.mubr.f32.gmra.mrb[0].mxu0 %v105
    %v348 = vpop.f32.mrb[0].mxu0
    %v349 = vadd.f32 %v196, %v348
    %v350 = vpop.f32.mrb[0].mxu0
    %v351 = vadd.f32 %v200, %v350
    %352 = vmatprep.mubr.f32.mxu0 0.0
    %353 = vmatmul.mubr.f32.gmra.mrb[0].mxu0 %v106
    %v354 = vpop.f32.mrb[0].mxu0
    %v355 = vadd.f32 %v196, %v354
    %v356 = vpop.f32.mrb[0].mxu0
    %v357 = vadd.f32 %v200, %v356
    %358 = vdwg.mxu0
    %v359 = vld [vmem:[%s8] sm:$0xff]
    %v360 = vld [vmem:[%s8 + $0x8] sm:$0xff]
    %v361 = vld [vmem:[%s8 + $0x10] sm:$0xff]
    %v362 = vld [vmem:[%s8 + $0x18] sm:$0xff]
    %v363 = vld [vmem:[%s8 + $0x20] sm:$0xff]
    %v364 = vld [vmem:[%s8 + $0x28] sm:$0xff]
    %v365 = vld [vmem:[%s8 + $0x30] sm:$0xff]
    %v366 = vld [vmem:[%s8 + $0x38] sm:$0xff]
    %v367 = vld [vmem:[%s8 + $0x40] sm:$0xff]
    %v368 = vld [vmem:[%s8 + $0x48] sm:$0xff]
    %v369 = vld [vmem:[%s8 + $0x50] sm:$0xff]
    %v370 = vld [vmem:[%s8 + $0x58] sm:$0xff]
    %v371 = vld [vmem:[%s8 + $0x60] sm:$0xff]
    %v372 = vld [vmem:[%s8 + $0x68] sm:$0xff]
    %v373 = vld [vmem:[%s8 + $0x70] sm:$0xff]
    %v374 = vld [vmem:[%s8 + $0x78] sm:$0xff]
    %v375 = vld [vmem:[%s9] sm:$0x1]
    %v377 = vlaneseq
    %v378 = vshrl.u32 %v377, 7
    %v379 = vsub.s32 0, %v378
    %v380 = vrot.slane %v375, %v379
    %382 = vmatprep.subr.mxu0 0.0
    %383 = vmatpush1.msra.mxu0 %v359
    %384 = vmatprep.subr.mxu0 0.0
    %385 = vmatpush1.msra.mxu0 %v360
    %386 = vmatprep.subr.mxu0 0.0
    %387 = vmatpush1.msra.mxu0 %v361
    %388 = vmatprep.subr.mxu0 0.0
    %389 = vmatpush1.msra.mxu0 %v362
    %390 = vmatprep.subr.mxu0 0.0
    %391 = vmatpush1.msra.mxu0 %v363
    %392 = vmatprep.subr.mxu0 0.0
    %393 = vmatpush1.msra.mxu0 %v364
    %394 = vmatprep.subr.mxu0 0.0
    %395 = vmatpush1.msra.mxu0 %v365
    %396 = vmatprep.subr.mxu0 0.0
    %397 = vmatpush1.msra.mxu0 %v366
    %398 = vmatprep.subr.mxu0 0.0
    %399 = vmatpush1.msra.mxu0 %v367
    %400 = vmatprep.subr.mxu0 0.0
    %401 = vmatpush1.msra.mxu0 %v368
    %402 = vmatprep.subr.mxu0 0.0
    %403 = vmatpush1.msra.mxu0 %v369
    %404 = vmatprep.subr.mxu0 0.0
    %405 = vmatpush1.msra.mxu0 %v370
    %406 = vmatprep.subr.mxu0 0.0
    %407 = vmatpush1.msra.mxu0 %v371
    %408 = vmatprep.subr.mxu0 0.0
    %409 = vmatpush1.msra.mxu0 %v372
    %410 = vmatprep.subr.mxu0 0.0
    %411 = vmatpush1.msra.mxu0 %v373
    %412 = vmatprep.subr.mxu0 0.0
    %413 = vmatpush1.msra.mxu0 %v374
    %414 = vmatprep.subr.mxu0 0.0
    %415 = vmatpush1.msra.mxu0 0.0
    %416 = vmatprep.subr.mxu0 0.0
    %417 = vmatpush1.msra.mxu0 0.0
    %418 = vmatprep.subr.mxu0 0.0
    %419 = vmatpush1.msra.mxu0 0.0
    %420 = vmatprep.subr.mxu0 0.0
    %421 = vmatpush1.msra.mxu0 0.0
    %422 = vmatprep.subr.mxu0 0.0
    %423 = vmatpush1.msra.mxu0 0.0
    %424 = vmatprep.subr.mxu0 0.0
    %425 = vmatpush1.msra.mxu0 0.0
    %426 = vmatprep.subr.mxu0 0.0
    %427 = vmatpush1.msra.mxu0 0.0
    %428 = vmatprep.subr.mxu0 0.0
    %429 = vmatpush1.msra.mxu0 0.0
    %430 = vmatprep.subr.mxu0 0.0
    %431 = vmatpush1.msra.mxu0 0.0
    %432 = vmatprep.subr.mxu0 0.0
    %433 = vmatpush1.msra.mxu0 0.0
    %434 = vmatprep.subr.mxu0 0.0
    %435 = vmatpush1.msra.mxu0 0.0
    %436 = vmatprep.subr.mxu0 0.0
    %437 = vmatpush1.msra.mxu0 0.0
    %438 = vmatprep.subr.mxu0 0.0
    %439 = vmatpush1.msra.mxu0 0.0
    %440 = vmatprep.subr.mxu0 0.0
    %441 = vmatpush1.msra.mxu0 0.0
    %442 = vmatprep.subr.mxu0 0.0
    %443 = vmatpush1.msra.mxu0 0.0
    %444 = vmatprep.subr.mxu0 0.0
    %445 = vmatpush1.msra.mxu0 0.0
    %446 = vmatprep.mubr.f32.mxu0 0.0
    %447 = vmatmul.mubr.f32.gmra.mrb[0].mxu0 %v107
    %v448 = vpop.f32.mrb[0].mxu0
    %v449 = vadd.f32 %v380, %v448
    %v450 = vpop.f32.mrb[0].mxu0
    %451 = vmatprep.mubr.f32.mxu0 0.0
    %452 = vmatmul.mubr.f32.gmra.mrb[0].mxu0 %v108
    %v453 = vpop.f32.mrb[0].mxu0
    %v454 = vadd.f32 %v380, %v453
    %v455 = vpop.f32.mrb[0].mxu0
    %456 = vmatprep.mubr.f32.mxu0 0.0
    %457 = vmatmul.mubr.f32.gmra.mrb[0].mxu0 %v109
    %v458 = vpop.f32.mrb[0].mxu0
    %v459 = vadd.f32 %v380, %v458
    %v460 = vpop.f32.mrb[0].mxu0
    %461 = vmatprep.mubr.f32.mxu0 0.0
    %462 = vmatmul.mubr.f32.gmra.mrb[0].mxu0 %v110
    %v463 = vpop.f32.mrb[0].mxu0
    %v464 = vadd.f32 %v380, %v463
    %v465 = vpop.f32.mrb[0].mxu0
    %466 = vdwg.mxu0
    %v467 = vpack.c.bf16 %v278, %v272
    %v468 = vpack.c.bf16 %v280, %v274
    %v473 = vunpack.c.l.b16 %v111
    %v474 = vunpack.c.l.b16 %v112
    %v475 = vunpack.c.l.b16 %v113
    %v476 = vunpack.c.l.b16 %v114
    %v477 = vpack.c.b16 %v474, %v473
    %v478 = vpack.c.b16 %v476, %v475
    %vm479 = vcmask 130048
    %v481 = vsel %vm479, %v477, 0
    %v484 = vsel %vm479, %v478, 0
    %486 = vmatprep.subr.bf16.mxu0 %v468
    %487 = vmatpush1.bf16.msra.mxu0 %v467
    %488 = vmatprep.subr.bf16.mxu0 0
    %489 = vmatpush1.bf16.msra.mxu0 0
    %490 = vmatprep.subr.bf16.mxu0 0
    %491 = vmatpush1.bf16.msra.mxu0 0
    %492 = vmatprep.subr.bf16.mxu0 0
    %493 = vmatpush1.bf16.msra.mxu0 0
    %494 = vmatprep.subr.bf16.mxu0 0
    %495 = vmatpush1.bf16.msra.mxu0 0
    %496 = vmatprep.subr.bf16.mxu0 0
    %497 = vmatpush1.bf16.msra.mxu0 0
    %498 = vmatprep.subr.bf16.mxu0 0
    %499 = vmatpush1.bf16.msra.mxu0 0
    %500 = vmatprep.subr.bf16.mxu0 0
    %501 = vmatpush1.bf16.msra.mxu0 0
    %502 = vmatprep.subr.bf16.mxu0 0
    %503 = vmatpush1.bf16.msra.mxu0 0
    %504 = vmatprep.subr.bf16.mxu0 0
    %505 = vmatpush1.bf16.msra.mxu0 0
    %506 = vmatprep.subr.bf16.mxu0 0
    %507 = vmatpush1.bf16.msra.mxu0 0
    %508 = vmatprep.subr.bf16.mxu0 0
    %509 = vmatpush1.bf16.msra.mxu0 0
    %510 = vmatprep.subr.bf16.mxu0 0
    %511 = vmatpush1.bf16.msra.mxu0 0
    %512 = vmatprep.subr.bf16.mxu0 0
    %513 = vmatpush1.bf16.msra.mxu0 0
    %514 = vmatprep.subr.bf16.mxu0 0
    %515 = vmatpush1.bf16.msra.mxu0 0
    %516 = vmatprep.subr.bf16.mxu0 0
    %517 = vmatpush1.bf16.msra.mxu0 0
    %518 = vmatprep.mubr.bf16.mxu0 0
    %519 = vmatmul.mubr.bf16.gmra.mrb[0].mxu0 %v481
    %v520 = vpop.f32.mrb[0].mxu0
    %v521 = vadd.f32 0.0, %v520
    %v522 = vpop.f32.mrb[0].mxu0
    %v523 = vadd.f32 0.0, %v522
    %v524 = vpop.f32.mrb[0].mxu0
    %v525 = vadd.f32 0.0, %v524
    %v526 = vpop.f32.mrb[0].mxu0
    %v527 = vadd.f32 0.0, %v526
    %528 = vmatprep.mubr.bf16.mxu0 0
    %529 = vmatmul.mubr.bf16.gmra.mrb[0].mxu0 %v484
    %v530 = vpop.f32.mrb[0].mxu0
    %v531 = vadd.f32 0.0, %v530
    %v532 = vpop.f32.mrb[0].mxu0
    %v533 = vadd.f32 0.0, %v532
    %v534 = vpop.f32.mrb[0].mxu0
    %v535 = vadd.f32 0.0, %v534
    %v536 = vpop.f32.mrb[0].mxu0
    %v537 = vadd.f32 0.0, %v536
    %538 = vdwg.mxu0
    %v539 = vpack.c.bf16 %v357, %v351
    %v544 = vunpack.c.l.b16 %v115
    %v545 = vunpack.c.l.b16 %v116
    %v546 = vunpack.c.l.b16 %v117
    %v547 = vunpack.c.l.b16 %v118
    %v548 = vpack.c.b16 %v545, %v544
    %v549 = vpack.c.b16 %v547, %v546
    %v551 = vsel %vm479, %v548, 0
    %v554 = vsel %vm479, %v549, 0
    %556 = vmatprep.subr.bf16.mxu0 0
    %557 = vmatpush1.bf16.msra.mxu0 %v539
    %558 = vmatprep.subr.bf16.mxu0 0
    %559 = vmatpush1.bf16.msra.mxu0 0
    %560 = vmatprep.subr.bf16.mxu0 0
    %561 = vmatpush1.bf16.msra.mxu0 0
    %562 = vmatprep.subr.bf16.mxu0 0
    %563 = vmatpush1.bf16.msra.mxu0 0
    %564 = vmatprep.subr.bf16.mxu0 0
    %565 = vmatpush1.bf16.msra.mxu0 0
    %566 = vmatprep.subr.bf16.mxu0 0
    %567 = vmatpush1.bf16.msra.mxu0 0
    %568 = vmatprep.subr.bf16.mxu0 0
    %569 = vmatpush1.bf16.msra.mxu0 0
    %570 = vmatprep.subr.bf16.mxu0 0
    %571 = vmatpush1.bf16.msra.mxu0 0
    %572 = vmatprep.subr.bf16.mxu0 0
    %573 = vmatpush1.bf16.msra.mxu0 0
    %574 = vmatprep.subr.bf16.mxu0 0
    %575 = vmatpush1.bf16.msra.mxu0 0
    %576 = vmatprep.subr.bf16.mxu0 0
    %577 = vmatpush1.bf16.msra.mxu0 0
    %578 = vmatprep.subr.bf16.mxu0 0
    %579 = vmatpush1.bf16.msra.mxu0 0
    %580 = vmatprep.subr.bf16.mxu0 0
    %581 = vmatpush1.bf16.msra.mxu0 0
    %582 = vmatprep.subr.bf16.mxu0 0
    %583 = vmatpush1.bf16.msra.mxu0 0
    %584 = vmatprep.subr.bf16.mxu0 0
    %585 = vmatpush1.bf16.msra.mxu0 0
    %586 = vmatprep.subr.bf16.mxu0 0
    %587 = vmatpush1.bf16.msra.mxu0 0
    %588 = vmatprep.mubr.bf16.mxu0 0
    %589 = vmatmul.mubr.bf16.gmra.mrb[0].mxu0 %v551
    %v590 = vpop.f32.mrb[0].mxu0
    %v591 = vadd.f32 0.0, %v590
    %v592 = vpop.f32.mrb[0].mxu0
    %v593 = vpop.f32.mrb[0].mxu0
    %v594 = vadd.f32 0.0, %v593
    %v595 = vpop.f32.mrb[0].mxu0
    %596 = vmatprep.mubr.bf16.mxu0 0
    %597 = vmatmul.mubr.bf16.gmra.mrb[0].mxu0 %v554
    %v598 = vpop.f32.mrb[0].mxu0
    %v599 = vadd.f32 0.0, %v598
    %v600 = vpop.f32.mrb[0].mxu0
    %v601 = vpop.f32.mrb[0].mxu0
    %v602 = vadd.f32 0.0, %v601
    %v603 = vpop.f32.mrb[0].mxu0
    %604 = vdwg.mxu0
    %v605 = vadd.f32 %v449, %v523
    %v606 = vadd.f32 %v454, %v527
    %v607 = vadd.f32 %v459, %v533
    %v608 = vadd.f32 %v464, %v537
    %v609 = vadd.f32 %v605, %v591
    %v610 = vadd.f32 %v606, %v594
    %v611 = vadd.f32 %v607, %v599
    %v612 = vadd.f32 %v608, %v602
    %v613 = vxor.u32 %v609, 2147483648
    %v614 = vxor.u32 %v610, 2147483648
    %v615 = vxor.u32 %v611, 2147483648
    %v616 = vxor.u32 %v612, 2147483648
    %v617 = vmul.f32 %v613, 1.442695
    %v618 = vpow.pop %v617
    %v619 = vmul.f32 %v614, 1.442695
    %v620 = vpow.pop %v619
    %v621 = vmul.f32 %v615, 1.442695
    %v622 = vpow.pop %v621
    %v623 = vmul.f32 %v616, 1.442695
    %v624 = vpow.pop %v623
    %v625 = vadd.f32 %v618, 1.0
    %v626 = vadd.f32 %v620, 1.0
    %v627 = vadd.f32 %v622, 1.0
    %v628 = vadd.f32 %v624, 1.0
    %v629 = vrcp.pop %v625
    %v630 = vmul.f32 1.0, %v629
    %v631 = vrcp.pop %v626
    %v632 = vmul.f32 1.0, %v631
    %v633 = vrcp.pop %v627
    %v634 = vmul.f32 1.0, %v633
    %v635 = vrcp.pop %v628
    %v636 = vmul.f32 1.0, %v635
    %v637 = vmul.f32 %v630, %v521
    %v638 = vmul.f32 %v632, %v525
    %v639 = vmul.f32 %v634, %v531
    %v640 = vmul.f32 %v636, %v535
    %v641 = vpack.c.bf16 %v638, %v637
    %v642 = vpack.c.bf16 %v632, %v630
    %v643 = vpack.c.bf16 %v640, %v639
    %v644 = vpack.c.bf16 %v636, %v634
    %647 = vxpose.xlu0.c.b16.start [1/8] %v548, 128
    %648 = vxpose.xlu0.c.b16.cont [2/8] %v549, 128
    %649 = vxpose.xlu0.c.b16.cont [3/8] 0, 128
    %650 = vxpose.xlu0.c.b16.cont [4/8] 0, 128
    %651 = vxpose.xlu0.c.b16.cont [5/8] 0, 128
    %652 = vxpose.xlu0.c.b16.cont [6/8] 0, 128
    %653 = vxpose.xlu0.c.b16.cont [7/8] 0, 128
    %654 = vxpose.xlu0.c.b16.end [8/8] 0, 128
    %v655 = vpop.trf.xlu0
    %v656 = vpop.trf.xlu0
    %v657 = vpop.trf.xlu0
    %v658 = vpop.trf.xlu0
    %v659 = vpop.trf.xlu0
    %v660 = vpop.trf.xlu0
    %v661 = vpop.trf.xlu0
    %v662 = vpop.trf.xlu0
    %vm663 = vcmask 261120
    %v665 = vsel %vm663, %v655, 0
    %667 = vmatprep.subr.bf16.mxu0 %v642
    %668 = vmatpush1.bf16.msra.mxu0 %v641
    %669 = vmatprep.subr.bf16.mxu0 %v644
    %670 = vmatpush1.bf16.msra.mxu0 %v643
    %671 = vmatprep.subr.bf16.mxu0 0
    %672 = vmatpush1.bf16.msra.mxu0 0
    %673 = vmatprep.subr.bf16.mxu0 0
    %674 = vmatpush1.bf16.msra.mxu0 0
    %675 = vmatprep.subr.bf16.mxu0 0
    %676 = vmatpush1.bf16.msra.mxu0 0
    %677 = vmatprep.subr.bf16.mxu0 0
    %678 = vmatpush1.bf16.msra.mxu0 0
    %679 = vmatprep.subr.bf16.mxu0 0
    %680 = vmatpush1.bf16.msra.mxu0 0
    %681 = vmatprep.subr.bf16.mxu0 0
    %682 = vmatpush1.bf16.msra.mxu0 0
    %683 = vmatprep.subr.bf16.mxu0 0
    %684 = vmatpush1.bf16.msra.mxu0 0
    %685 = vmatprep.subr.bf16.mxu0 0
    %686 = vmatpush1.bf16.msra.mxu0 0
    %687 = vmatprep.subr.bf16.mxu0 0
    %688 = vmatpush1.bf16.msra.mxu0 0
    %689 = vmatprep.subr.bf16.mxu0 0
    %690 = vmatpush1.bf16.msra.mxu0 0
    %691 = vmatprep.subr.bf16.mxu0 0
    %692 = vmatpush1.bf16.msra.mxu0 0
    %693 = vmatprep.subr.bf16.mxu0 0
    %694 = vmatpush1.bf16.msra.mxu0 0
    %695 = vmatprep.subr.bf16.mxu0 0
    %696 = vmatpush1.bf16.msra.mxu0 0
    %697 = vmatprep.subr.bf16.mxu0 0
    %698 = vmatpush1.bf16.msra.mxu0 0
    %699 = vmatprep.mubr.bf16.mxu0 0
    %700 = vmatmul.mubr.bf16.gmra.mrb[0].mxu0 %v665
    %v701 = vpop.f32.mrb[0].mxu0
    %v702 = vadd.f32 0.0, %v701
    %v703 = vpop.f32.mrb[0].mxu0
    %v704 = vadd.f32 0.0, %v703
    %v705 = vpop.f32.mrb[0].mxu0
    %v706 = vadd.f32 0.0, %v705
    %v707 = vpop.f32.mrb[0].mxu0
    %v708 = vadd.f32 0.0, %v707
    %709 = vdwg.mxu0
    %v710 = vadd.f32 %v704, 1e-06
    %v711 = vadd.f32 %v708, 1e-06
    %v712 = vrcp.pop %v710
    %v713 = vrcp.pop %v711
    %v714 = vmul.f32 %v702, %v712
    %v715 = vmul.f32 %v706, %v713
    %v716 = vadd.f32 %v349, %v714
    %v717 = vadd.f32 %v355, %v715
    %v718 = vld [vmem:[%s4] sm:$0xff]
    %v719 = vld [vmem:[%s4 + $0x8] sm:$0xff]
    %721 = vset.pattern.permute.xlu0 0
    %722 = vperm.xlu0 %721, %v718
    %v723 = vpop.permute.xlu0 %722
    %726 = vset.pattern.permute.xlu0 0
    %727 = vperm.xlu0 %726, %v719
    %v728 = vpop.permute.xlu0 %727
    %v730 = vmul.f32 %v716, %v723
    %v731 = vmul.f32 %v717, %v728
    %v732 = vld [vmem:[%s5] sm:$0xff]
    %v733 = vld [vmem:[%s5 + $0x8] sm:$0xff]
    %v734 = vld [vmem:[%s5 + $0x10] sm:$0xff]
    %v735 = vld [vmem:[%s5 + $0x18] sm:$0xff]
    %737 = vset.pattern.permute.xlu0 0
    %738 = vperm.xlu0 %737, %v732
    %v739 = vpop.permute.xlu0 %738
    %742 = vset.pattern.permute.xlu0 0
    %743 = vperm.xlu0 %742, %v733
    %v744 = vpop.permute.xlu0 %743
    %747 = vset.pattern.permute.xlu0 0
    %748 = vperm.xlu0 %747, %v734
    %v749 = vpop.permute.xlu0 %748
    %752 = vset.pattern.permute.xlu0 0
    %753 = vperm.xlu0 %752, %v735
    %v754 = vpop.permute.xlu0 %753
    %v756 = vmul.f32 %v609, %v739
    %v757 = vmul.f32 %v610, %v744
    %v758 = vmul.f32 %v611, %v749
    %v759 = vmul.f32 %v612, %v754
    %v760 = vld [vmem:[%s10] sm:$0x1]
    %v761 = vld [vmem:[%s11] sm:$0x1]
    %v762 = vadd.f32 %v730, %v731
    %v763 = vrot.slane %v762, 4
    %v764 = vadd.f32 %v762, %v763
    %v765 = vrot.slane %v764, 2
    %v766 = vadd.f32 %v764, %v765
    %v767 = vrot.slane %v766, 1
    %v768 = vadd.f32 %v766, %v767
    %v769 = vrcp.pop 16.0
    %v770 = vmul.f32 %v768, %v769
    %v771 = vsub.f32 %v730, %v770
    %v772 = vsub.f32 %v731, %v770
    %v773 = vmul.f32 %v771, %v771
    %v774 = vmul.f32 %v772, %v772
    %v775 = vadd.f32 %v773, %v774
    %v776 = vrot.slane %v775, 4
    %v777 = vadd.f32 %v775, %v776
    %v778 = vrot.slane %v777, 2
    %v779 = vadd.f32 %v777, %v778
    %v780 = vrot.slane %v779, 1
    %v781 = vadd.f32 %v779, %v780
    %v782 = vmul.f32 %v781, %v769
    %v783 = vadd.f32 %v782, 1e-05
    %v784 = vrsqrt.pop %v783
    %v785 = vmul.f32 %v771, %v784
    %v786 = vmul.f32 %v772, %v784
    %v788 = vlaneseq
    %v789 = vshrl.u32 %v788, 7
    %v790 = vsub.s32 0, %v789
    %v791 = vrot.slane %v760, %v790
    %v793 = vmul.f32 %v785, %v791
    %v794 = vmul.f32 %v786, %v791
    %v796 = vlaneseq
    %v797 = vshrl.u32 %v796, 7
    %v798 = vsub.s32 0, %v797
    %v799 = vrot.slane %v761, %v798
    %v801 = vadd.f32 %v793, %v799
    %v802 = vadd.f32 %v794, %v799
    %v803 = vmax.f32 %v801, 0.0
    %v804 = vmax.f32 %v802, 0.0
    %v805 = vadd.f32 %v105, %v803
    %v806 = vadd.f32 %v106, %v804
    %807 = vst [vmem:[#allocation10] sm:$0xff] %v805
    %808 = vst [vmem:[#allocation10 + $0x8] sm:$0xff] %v806
    %v809 = vld [vmem:[%s12] sm:$0x1]
    %v810 = vld [vmem:[%s13] sm:$0x1]
    %v811 = vadd.f32 %v756, %v757
    %v812 = vadd.f32 %v811, %v758
    %v813 = vadd.f32 %v812, %v759
    %v814 = vrot.slane %v813, 4
    %v815 = vadd.f32 %v813, %v814
    %v816 = vrot.slane %v815, 2
    %v817 = vadd.f32 %v815, %v816
    %v818 = vrot.slane %v817, 1
    %v819 = vadd.f32 %v817, %v818
    %v820 = vrcp.pop 32.0
    %v821 = vmul.f32 %v819, %v820
    %v822 = vsub.f32 %v756, %v821
    %v823 = vsub.f32 %v757, %v821
    %v824 = vsub.f32 %v758, %v821
    %v825 = vsub.f32 %v759, %v821
    %v826 = vmul.f32 %v822, %v822
    %v827 = vmul.f32 %v823, %v823
    %v828 = vmul.f32 %v824, %v824
    %v829 = vmul.f32 %v825, %v825
    %v830 = vadd.f32 %v826, %v827
    %v831 = vadd.f32 %v830, %v828
    %v832 = vadd.f32 %v831, %v829
    %v833 = vrot.slane %v832, 4
    %v834 = vadd.f32 %v832, %v833
    %v835 = vrot.slane %v834, 2
    %v836 = vadd.f32 %v834, %v835
    %v837 = vrot.slane %v836, 1
    %v838 = vadd.f32 %v836, %v837
    %v839 = vmul.f32 %v838, %v820
    %v840 = vadd.f32 %v839, 1e-05
    %v841 = vrsqrt.pop %v840
    %v842 = vmul.f32 %v822, %v841
    %v843 = vmul.f32 %v823, %v841
    %v844 = vmul.f32 %v824, %v841
    %v845 = vmul.f32 %v825, %v841
    %v847 = vlaneseq
    %v848 = vshrl.u32 %v847, 7
    %v849 = vsub.s32 0, %v848
    %v850 = vrot.slane %v809, %v849
    %v852 = vmul.f32 %v842, %v850
    %v853 = vmul.f32 %v843, %v850
    %v854 = vmul.f32 %v844, %v850
    %v855 = vmul.f32 %v845, %v850
    %v857 = vlaneseq
    %v858 = vshrl.u32 %v857, 7
    %v859 = vsub.s32 0, %v858
    %v860 = vrot.slane %v810, %v859
    %v862 = vadd.f32 %v852, %v860
    %v863 = vadd.f32 %v853, %v860
    %v864 = vadd.f32 %v854, %v860
    %v865 = vadd.f32 %v855, %v860
    %v866 = vmax.f32 %v862, 0.0
    %v867 = vmax.f32 %v863, 0.0
    %v868 = vmax.f32 %v864, 0.0
    %v869 = vmax.f32 %v865, 0.0
    %v870 = vadd.f32 %v107, %v866
    %v871 = vadd.f32 %v108, %v867
    %v872 = vadd.f32 %v109, %v868
    %v873 = vadd.f32 %v110, %v869
    %874 = vst [vmem:[#allocation11] sm:$0xff] %v870
    %875 = vst [vmem:[#allocation11 + $0x8] sm:$0xff] %v871
    %876 = vst [vmem:[#allocation11 + $0x10] sm:$0xff] %v872
    %877 = vst [vmem:[#allocation11 + $0x18] sm:$0xff] %v873
    // Predicated region
    $region74: #{tpu_custom_call.1} parent=1 // pred_check
      _
    $region75: #{tpu_custom_call.1} parent=1 // pred_check_branch
      %879 = sbr.rel (0) target = $region77
    $region76: #{tpu_custom_call.1} parent=1 // pred_region
      %s881 = ssub.s32 256, 256
      %882 = vsyncadd [#allocation4], %s881
      %s883 = sshll.u32 [#allocation10], 4
      %s884 = int_to_ptr.vmem [resolvable:$true] %s883
      %889 = dma.vmem_to_hbm [thread:$0]  %s884, 256, %s14, [#allocation4], 128, 128, 8
    $region77: #{tpu_custom_call.1} parent=1 // pred_fallthru
      _
    // Predicated region
    $region78: #{tpu_custom_call.1} parent=1 // pred_check
      _
    $region79: #{tpu_custom_call.1} parent=1 // pred_check_branch
      %891 = sbr.rel (0) target = $region81
    $region80: #{tpu_custom_call.1} parent=1 // pred_region
      %s893 = ssub.s32 512, 512
      %894 = vsyncadd [#allocation12], %s893
      %s895 = sshll.u32 [#allocation11], 4
      %s896 = int_to_ptr.vmem [resolvable:$true] %s895
      %901 = dma.vmem_to_hbm [thread:$0]  %s896, 512, %s15, [#allocation12], 128, 128, 8
    $region81: #{tpu_custom_call.1} parent=1 // pred_fallthru
      _
    // Predicated region
    $region82: #{tpu_custom_call.1} parent=1 // pred_check
      _
    $region83: #{tpu_custom_call.1} parent=1 // pred_check_branch
      %903 = sbr.rel (0) target = $region85
    $region84: #{tpu_custom_call.1} parent=1 // pred_region
      %904 = dma.done [#allocation4], 256
    $region85: #{tpu_custom_call.1} parent=1 // pred_fallthru
      _
    // Predicated region
    $region86: #{tpu_custom_call.1} parent=1 // pred_check
      _
    $region87: #{tpu_custom_call.1} parent=1 // pred_check_branch
      %906 = sbr.rel (0) target = $region89
    $region88: #{tpu_custom_call.1} parent=1 // pred_region
      %907 = dma.done [#allocation12], 512
    $region89: #{tpu_custom_call.1} parent=1 // pred_fallthru
      _
    %908 = vsyncpa [#allocation3], 1
    %909 = vsyncpa [#allocation6], 1
    %910 = vsyncpa [#allocation9], 1
    %911 = vsyncpa [#allocation4], 1
    %912 = vsyncpa [#allocation12], 1

</llo_original>
